<compile_context>
chip_gen: v6e
topology: v6e:2x2x1
jax: 0.10.0
libtpu: 0.0.40
codegen_flags: <defaults>
</compile_context>

<pallas_src>
import functools

import jax
import jax.numpy as jnp
import numpy as np
from jax.experimental import pallas as pl
from jax.experimental.pallas import tpu as pltpu


# ---------------------------------------------------------------------------
# Small helpers
# ---------------------------------------------------------------------------

def _round_up(n, m):
    return ((n + m - 1) // m) * m


def _vmem_limit_bytes(*nbytes):
    """2x (double-buffer) the listed buffers + margin, clamped to v7x's 64 MiB."""
    need = 2 * int(sum(nbytes)) + (2 << 20)
    return int(min(max(need, 16 << 20), 64 << 20))


def prepare_params(params, masks, mm_dtype=jnp.bfloat16):
    """Fold task masks, pad per gate to lane geometry, pre-transpose for the MXU.

    Returns
      wxT : (I, 3*Hp)  mm_dtype   (gate-major columns, 128-aligned per gate)
      bx  : (1, 3*Hp)  float32
      whT : (Hp, 3*Hp) mm_dtype   (padded h-input rows are zero)
      bh  : (1, 3*Hp)  float32
      Hp  : padded hidden size (multiple of 128)
    Masks change per task, not per step, so this runs outside the hot path.
    """
    H = params["wh"].shape[1]
    I = params["wx"].shape[1]
    Hp = _round_up(H, 128)

    wx = (params["wx"] * masks["wx"]).reshape(3, H, I)
    wh = (params["wh"] * masks["wh"]).reshape(3, H, H)
    bx = (params["bx"] * masks["bx"]).reshape(3, H)
    bh = (params["bh"] * masks["bh"]).reshape(3, H)

    wx = jnp.pad(wx, ((0, 0), (0, Hp - H), (0, 0)))          # (3, Hp, I)
    wh = jnp.pad(wh, ((0, 0), (0, Hp - H), (0, Hp - H)))     # (3, Hp, Hp)
    bx = jnp.pad(bx, ((0, 0), (0, Hp - H)))                  # (3, Hp)
    bh = jnp.pad(bh, ((0, 0), (0, Hp - H)))                  # (3, Hp)

    wxT = wx.transpose(2, 0, 1).reshape(I, 3 * Hp).astype(mm_dtype)
    whT = wh.transpose(2, 0, 1).reshape(Hp, 3 * Hp).astype(mm_dtype)
    bx = bx.reshape(1, 3 * Hp).astype(jnp.float32)
    bh = bh.reshape(1, 3 * Hp).astype(jnp.float32)
    return wxT, bx, whT, bh, Hp


# ---------------------------------------------------------------------------
# Kernel bodies
# ---------------------------------------------------------------------------

def _gru_cell_kernel(x_ref, h_ref, wxT_ref, bx_ref, whT_ref, bh_ref, hy_ref,
                     *, hp, mm_dtype):
    """Single GRU step. Shapes are padded: (Bp,I),(Bp,Hp),(I,3Hp),(1,3Hp),(Hp,3Hp)."""
    x = x_ref[...]
    h = h_ref[...].astype(jnp.float32)
    gx = jnp.dot(x.astype(mm_dtype), wxT_ref[...],
                 preferred_element_type=jnp.float32) + bx_ref[...]
    gh = jnp.dot(h.astype(mm_dtype), whT_ref[...],
                 preferred_element_type=jnp.float32) + bh_ref[...]
    r = jax.nn.sigmoid(gx[:, :hp] + gh[:, :hp])
    z = jax.nn.sigmoid(gx[:, hp:2 * hp] + gh[:, hp:2 * hp])
    n = jnp.tanh(gx[:, 2 * hp:] + r * gh[:, 2 * hp:])
    hy = z * h + (1.0 - z) * n
    hy_ref[...] = hy.astype(hy_ref.dtype)


def _input_proj_kernel(x_ref, wxT_ref, bx_ref, gx_ref, *, mm_dtype):
    """Time-parallel input projection: gx = x @ WxT + bx for a (TS*Bp, I) block."""
    x = x_ref[...].astype(mm_dtype)
    gx = jnp.dot(x, wxT_ref[...], preferred_element_type=jnp.float32) + bx_ref[...]
    gx_ref[...] = gx


def _gru_seq_kernel(gx_ref, h0_ref, whT_ref, bh_ref, hy_ref, h_scratch,
                    *, ts, bp, hp, mm_dtype):
    """Serial recurrence: only the h2h matmul lives in the loop.

    gx_ref : (TS*Bp, 3Hp) f32   precomputed x-projection for TS timesteps (streamed)
    h0_ref : (Bp, Hp)           initial hidden state (VMEM resident)
    whT_ref: (Hp, 3Hp) mm_dtype h2h weight (VMEM resident)
    bh_ref : (1, 3Hp) f32       h2h bias (resident)
    hy_ref : (TS*Bp, Hp)        hidden states for the TS timesteps of this block
    h_scratch: VMEM (Bp, Hp) f32 carry across grid steps
    """
    @pl.when(pl.program_id(0) == 0)
    def _():
        h_scratch[...] = h0_ref[...].astype(jnp.float32)

    h = h_scratch[...]
    whT = whT_ref[...]
    bh = bh_ref[...]
    for t in range(ts):  # small static unroll (TS timesteps per grid step)
        gx_t = gx_ref[t * bp:(t + 1) * bp, :]
        gh = jnp.dot(h.astype(mm_dtype), whT,
                     preferred_element_type=jnp.float32) + bh
        r = jax.nn.sigmoid(gx_t[:, :hp] + gh[:, :hp])
        z = jax.nn.sigmoid(gx_t[:, hp:2 * hp] + gh[:, hp:2 * hp])
        n = jnp.tanh(gx_t[:, 2 * hp:] + r * gh[:, 2 * hp:])
        h = z * h + (1.0 - z) * n
        hy_ref[t * bp:(t + 1) * bp, :] = h.astype(hy_ref.dtype)
    h_scratch[...] = h


# ---------------------------------------------------------------------------
# Wrappers
# ---------------------------------------------------------------------------

def gru_cell_forward(x, hx, params, masks, mm_dtype=jnp.bfloat16):
    """Single GRU step (mirrors the PyTorch module's forward()).

    x  : (B, I) float32
    hx : (B, H) float32 or None (zeros, matching the PyTorch module)
    params = dict(wx=(3H,I), bx=(3H,), wh=(3H,H), bh=(3H,)); masks same shapes.
    """
    B, I = x.shape
    H = params["wh"].shape[1]
    if hx is None:
        hx = jnp.zeros((B, H), dtype=x.dtype)

    wxT, bx, whT, bh, Hp = prepare_params(params, masks, mm_dtype)
    Bp = _round_up(B, 8)
    H3 = 3 * Hp
    itm = jnp.dtype(mm_dtype).itemsize

    x_p = jnp.pad(x, ((0, Bp - B), (0, 0)))
    h_p = jnp.pad(hx, ((0, Bp - B), (0, Hp - H)))

    vmem = pl.BlockSpec(memory_space=pltpu.MemorySpace.VMEM)
    limit = _vmem_limit_bytes(Bp * I * 4, Bp * Hp * 4, I * H3 * itm,
                              H3 * 4, Hp * H3 * itm, H3 * 4, Bp * Hp * 4)

    hy_p = pl.pallas_call(
        functools.partial(_gru_cell_kernel, hp=Hp, mm_dtype=mm_dtype),
        out_shape=jax.ShapeDtypeStruct((Bp, Hp), x.dtype),
        in_specs=[vmem] * 6,
        out_specs=vmem,
        # hy overwrites the padded hidden-state buffer in place (saves one
        # (Bp,Hp) HBM round-trip per step when driven from an outer loop).
        input_output_aliases={1: 0},
        compiler_params=pltpu.CompilerParams(vmem_limit_bytes=limit),
    )(x_p, h_p, wxT, bx, whT, bh)
    # TODO(synk): for very large H, tile the 3H gate columns with a grid axis
    # (weights are already laid out gate-major, so tiles stay 128-aligned).
    return hy_p[:B, :H]


def gru_sequence_forward(xs, h0, params, masks, mm_dtype=jnp.bfloat16, ts=4):
    """Apply the GRU cell over a sequence.

    xs : (T, B, I) float32 ;  h0 : (B, H) float32 or None.
    Returns hy : (T, B, H), the hidden state after every timestep.

    Stage 1 (parallel grid): gx = xs @ WxT + bx for all timesteps at once.
    Stage 2 (serial grid)  : recurrence with only the h2h matmul per step,
                             TS timesteps per grid step, WhT resident in VMEM.
    Note: the hidden-state carry is kept in f32 even if xs is bf16.
    """
    T, B, I = xs.shape
    H = params["wh"].shape[1]
    if h0 is None:
        h0 = jnp.zeros((B, H), dtype=xs.dtype)

    wxT, bx, whT, bh, Hp = prepare_params(params, masks, mm_dtype)
    Bp = _round_up(B, 8)
    H3 = 3 * Hp
    itm = jnp.dtype(mm_dtype).itemsize

    ts = max(1, min(ts, T))
    Tp = _round_up(T, ts)
    num_blocks = Tp // ts
    rows = ts * Bp

    xs_p = jnp.pad(xs, ((0, Tp - T), (0, Bp - B), (0, 0)))
    xs2d = xs_p.reshape(Tp * Bp, I)
    h0_p = jnp.pad(h0, ((0, Bp - B), (0, Hp - H)))

    # ---- Stage 1: time-parallel input projection (full MXU row occupancy; the
    # parallel axis lets v7x's two TensorCores split it). ----
    limit1 = _vmem_limit_bytes(rows * I * 4, I * H3 * itm, H3 * 4, rows * H3 * 4)
    gx = pl.pallas_call(
        functools.partial(_input_proj_kernel, mm_dtype=mm_dtype),
        out_shape=jax.ShapeDtypeStruct((Tp * Bp, H3), jnp.float32),
        grid=(num_blocks,),
        in_specs=[
            pl.BlockSpec((rows, I), lambda i: (i, 0)),     # x block, streamed
            pl.BlockSpec((I, H3), lambda i: (0, 0)),       # WxT resident
            pl.BlockSpec((1, H3), lambda i: (0, 0)),       # bx resident
        ],
        out_specs=pl.BlockSpec((rows, H3), lambda i: (i, 0)),
        compiler_params=pltpu.CompilerParams(
            dimension_semantics=("parallel",),
            vmem_limit_bytes=limit1),
    )(xs2d, wxT, bx)

    # ---- Stage 2: serial recurrence (time axis is "arbitrary"). ----
    limit2 = _vmem_limit_bytes(rows * H3 * 4, Bp * Hp * 4, Hp * H3 * itm,
                               H3 * 4, rows * Hp * 4, Bp * Hp * 4)
    hy2d = pl.pallas_call(
        functools.partial(_gru_seq_kernel, ts=ts, bp=Bp, hp=Hp, mm_dtype=mm_dtype),
        out_shape=jax.ShapeDtypeStruct((Tp * Bp, Hp), xs.dtype),
        grid=(num_blocks,),
        in_specs=[
            pl.BlockSpec((rows, H3), lambda i: (i, 0)),    # gx block, streamed
            pl.BlockSpec((Bp, Hp), lambda i: (0, 0)),      # h0 resident
            pl.BlockSpec((Hp, H3), lambda i: (0, 0)),      # WhT resident
            pl.BlockSpec((1, H3), lambda i: (0, 0)),       # bh resident
        ],
        out_specs=pl.BlockSpec((rows, Hp), lambda i: (i, 0)),
        scratch_shapes=[pltpu.VMEM((Bp, Hp), jnp.float32)],
        compiler_params=pltpu.CompilerParams(
            dimension_semantics=("arbitrary",),
            vmem_limit_bytes=limit2),
    )(gx, h0_p, whT, bh)

    return hy2d.reshape(Tp, Bp, Hp)[:T, :B, :H]


# ---------------------------------------------------------------------------
# Pure-JAX references (mirror the PyTorch forward())
# ---------------------------------------------------------------------------

def _reference_forward(x, hx, params, masks):
    H = params["wh"].shape[1]
    if hx is None:
        hx = jnp.zeros((x.shape[0], H), dtype=x.dtype)
    wx = params["wx"] * masks["wx"]
    bx = params["bx"] * masks["bx"]
    wh = params["wh"] * masks["wh"]
    bh = params["bh"] * masks["bh"]
    x_t = x @ wx.T + bx
    h_t = hx @ wh.T + bh
    x_r, x_u, x_n = x_t[:, :H], x_t[:, H:2 * H], x_t[:, 2 * H:]
    h_r, h_u, h_n = h_t[:, :H], h_t[:, H:2 * H], h_t[:, 2 * H:]
    r = jax.nn.sigmoid(x_r + h_r)
    z = jax.nn.sigmoid(x_u + h_u)
    n = jnp.tanh(x_n + r * h_n)
    return z * hx + (1.0 - z) * n


def _reference_sequence(xs, h0, params, masks):
    def step(h, x):
        hy = _reference_forward(x, h, params, masks)
        return hy, hy
    _, ys = jax.lax.scan(step, h0, xs)
    return ys


# ---------------------------------------------------------------------------
# Demo / self-test
# ---------------------------------------------------------------------------

if __name__ == "__main__":
    batch, input_size, hidden_size, seq_len = 2, 16, 32, 8

    key = jax.random.PRNGKey(0)
    k_x, k_h, k_xs, k_wx, k_bx, k_wh, k_bh = jax.random.split(key, 7)

    # reset_parameters(): uniform(-std, std) with std = 1/sqrt(hidden_size)
    std = 1.0 / np.sqrt(hidden_size)
    params = {
        "wx": jax.random.uniform(k_wx, (3 * hidden_size, input_size),
                                 minval=-std, maxval=std, dtype=jnp.float32),
        "bx": jax.random.uniform(k_bx, (3 * hidden_size,),
                                 minval=-std, maxval=std, dtype=jnp.float32),
        "wh": jax.random.uniform(k_wh, (3 * hidden_size, hidden_size),
                                 minval=-std, maxval=std, dtype=jnp.float32),
        "bh": jax.random.uniform(k_bh, (3 * hidden_size,),
                                 minval=-std, maxval=std, dtype=jnp.float32),
    }
    # base_masks / tasks_masks[task_id]: all-ones masks of the parameter shapes.
    masks = {k: jnp.ones_like(v) for k, v in params.items()}

    x = jax.random.normal(k_x, (batch, input_size), dtype=jnp.float32)
    hx = jax.random.normal(k_h, (batch, hidden_size), dtype=jnp.float32)
    xs = jax.random.normal(k_xs, (seq_len, batch, input_size), dtype=jnp.float32)

    hy_ref = _reference_forward(x, hx, params, masks)
    hys_ref = _reference_sequence(xs, hx, params, masks)

    # Exact path (f32 matmul operands) — tight check against the f32 reference.
    hy32 = jax.block_until_ready(
        gru_cell_forward(x, hx, params, masks, mm_dtype=jnp.float32))
    np.testing.assert_allclose(np.asarray(hy32), np.asarray(hy_ref),
                               rtol=1e-5, atol=1e-5)
    hys32 = jax.block_until_ready(
        gru_sequence_forward(xs, hx, params, masks, mm_dtype=jnp.float32))
    np.testing.assert_allclose(np.asarray(hys32), np.asarray(hys_ref),
                               rtol=1e-5, atol=1e-5)

    # Fast path (bf16 matmul operands, f32 accumulation/carry) — loose check.
    hy = jax.block_until_ready(gru_cell_forward(x, hx, params, masks))
    np.testing.assert_allclose(np.asarray(hy), np.asarray(hy_ref),
                               rtol=5e-2, atol=5e-2)
    hys = jax.block_until_ready(gru_sequence_forward(xs, hx, params, masks))
    np.testing.assert_allclose(np.asarray(hys), np.asarray(hys_ref),
                               rtol=5e-2, atol=5e-2)

    print("KERNEL_OK")
</pallas_src>

<mosaic_0001>
module attributes {stable_mosaic.version = 11 : i64} {
  func.func @_gru_cell_kernel(%arg0: memref<8x16xf32, #tpu.memory_space<vmem>>, %arg1: memref<8x128xf32, #tpu.memory_space<vmem>>, %arg2: memref<16x384xf32, #tpu.memory_space<vmem>>, %arg3: memref<1x384xf32, #tpu.memory_space<vmem>>, %arg4: memref<128x384xf32, #tpu.memory_space<vmem>>, %arg5: memref<1x384xf32, #tpu.memory_space<vmem>>, %arg6: memref<8x128xf32, #tpu.memory_space<vmem>>) attributes {dimension_semantics = [], scalar_prefetch = 0 : i64, scratch_operands = 0 : i64, tpu.core_type = #tpu.core_type<tc>} {
    %c0 = arith.constant 0 : index
    %c0_0 = arith.constant 0 : index
    %0 = vector.load %arg0[%c0, %c0_0] : memref<8x16xf32, #tpu.memory_space<vmem>>, vector<8x16xf32>
    %c0_1 = arith.constant 0 : index
    %c0_2 = arith.constant 0 : index
    %1 = vector.load %arg1[%c0_1, %c0_2] : memref<8x128xf32, #tpu.memory_space<vmem>>, vector<8x128xf32>
    %c0_3 = arith.constant 0 : index
    %c0_4 = arith.constant 0 : index
    %2 = vector.load %arg2[%c0_3, %c0_4] : memref<16x384xf32, #tpu.memory_space<vmem>>, vector<16x384xf32>
    %cst = arith.constant dense<0.000000e+00> : vector<8x384xf32>
    %3 = tpu.matmul %0, %2, %cst {dimension_numbers = #tpu.dot_dimension_numbers<[1], [0], [0], [1], [0, 0, 1, 1], [], []>} : vector<8x16xf32>, vector<16x384xf32>, vector<8x384xf32> -> vector<8x384xf32>
    %c0_5 = arith.constant 0 : index
    %c0_6 = arith.constant 0 : index
    %4 = vector.load %arg3[%c0_5, %c0_6] : memref<1x384xf32, #tpu.memory_space<vmem>>, vector<1x384xf32>
    %5 = vector.broadcast %4 : vector<1x384xf32> to vector<8x384xf32>
    %6 = arith.addf %3, %5 : vector<8x384xf32>
    %c0_7 = arith.constant 0 : index
    %c0_8 = arith.constant 0 : index
    %7 = vector.load %arg4[%c0_7, %c0_8] : memref<128x384xf32, #tpu.memory_space<vmem>>, vector<128x384xf32>
    %cst_9 = arith.constant dense<0.000000e+00> : vector<8x384xf32>
    %8 = tpu.matmul %1, %7, %cst_9 {dimension_numbers = #tpu.dot_dimension_numbers<[1], [0], [0], [1], [0, 0, 1, 1], [], []>} : vector<8x128xf32>, vector<128x384xf32>, vector<8x384xf32> -> vector<8x384xf32>
    %c0_10 = arith.constant 0 : index
    %c0_11 = arith.constant 0 : index
    %9 = vector.load %arg5[%c0_10, %c0_11] : memref<1x384xf32, #tpu.memory_space<vmem>>, vector<1x384xf32>
    %10 = vector.broadcast %9 : vector<1x384xf32> to vector<8x384xf32>
    %11 = arith.addf %8, %10 : vector<8x384xf32>
    %12 = vector.extract_strided_slice %6 {offsets = [0, 0], sizes = [8, 128], strides = [1, 1]} : vector<8x384xf32> to vector<8x128xf32>
    %13 = vector.extract_strided_slice %11 {offsets = [0, 0], sizes = [8, 128], strides = [1, 1]} : vector<8x384xf32> to vector<8x128xf32>
    %14 = arith.addf %12, %13 : vector<8x128xf32>
    %15 = arith.negf %14 : vector<8x128xf32>
    %16 = math.exp %15 : vector<8x128xf32>
    %cst_12 = arith.constant 1.000000e+00 : f32
    %17 = vector.broadcast %cst_12 : f32 to vector<8x128xf32>
    %18 = arith.addf %17, %16 : vector<8x128xf32>
    %19 = arith.divf %17, %18 : vector<8x128xf32>
    %20 = vector.extract_strided_slice %6 {offsets = [0, 128], sizes = [8, 128], strides = [1, 1]} : vector<8x384xf32> to vector<8x128xf32>
    %21 = vector.extract_strided_slice %11 {offsets = [0, 128], sizes = [8, 128], strides = [1, 1]} : vector<8x384xf32> to vector<8x128xf32>
    %22 = arith.addf %20, %21 : vector<8x128xf32>
    %23 = arith.negf %22 : vector<8x128xf32>
    %24 = math.exp %23 : vector<8x128xf32>
    %cst_13 = arith.constant 1.000000e+00 : f32
    %25 = vector.broadcast %cst_13 : f32 to vector<8x128xf32>
    %26 = arith.addf %25, %24 : vector<8x128xf32>
    %27 = arith.divf %25, %26 : vector<8x128xf32>
    %28 = vector.extract_strided_slice %6 {offsets = [0, 256], sizes = [8, 128], strides = [1, 1]} : vector<8x384xf32> to vector<8x128xf32>
    %29 = vector.extract_strided_slice %11 {offsets = [0, 256], sizes = [8, 128], strides = [1, 1]} : vector<8x384xf32> to vector<8x128xf32>
    %30 = arith.mulf %19, %29 : vector<8x128xf32>
    %31 = arith.addf %28, %30 : vector<8x128xf32>
    %32 = math.tanh %31 : vector<8x128xf32>
    %33 = arith.mulf %27, %1 : vector<8x128xf32>
    %cst_14 = arith.constant 1.000000e+00 : f32
    %34 = vector.broadcast %cst_14 : f32 to vector<8x128xf32>
    %35 = arith.subf %34, %27 : vector<8x128xf32>
    %36 = arith.mulf %35, %32 : vector<8x128xf32>
    %37 = arith.addf %33, %36 : vector<8x128xf32>
    %c0_15 = arith.constant 0 : index
    %c0_16 = arith.constant 0 : index
    %38 = vector.load %arg6[%c0_15, %c0_16] : memref<8x128xf32, #tpu.memory_space<vmem>>, vector<8x128xf32>
    tpu.vector_store %arg6[%c0_15, %c0_16], %37 {strides = array<i32>} : memref<8x128xf32, #tpu.memory_space<vmem>>, vector<8x128xf32>,
    return
  }
}

</mosaic_0001>

<llo_original>
// kernel: tpu_custom_call.1
$region0: #{tpu_custom_call.1}
  #allocation0 [shape = 'u32[]', space=smem, size = 0x4, offset = 0x4, fixed_abs, tag = 'smem constant byte address 0x4 - core index']
  #allocation1 [shape = 'u32[144,128]{1,0:T(1,128)}', space=vmem, size = 0x12000, scoped, tag = 'internal scratch']
  %s0 = inlined_call_operand.vmem [shape: f32[8,16], index: 0, kind: input, shape index: {}]
  %s1 = inlined_call_operand.hbm [shape: f32[8,128], index: 1, kind: input, shape index: {}, may-alias: {1,6}]
  %s2 = inlined_call_operand.hbm [shape: f32[16,384], index: 2, kind: input, shape index: {}]
  %s3 = inlined_call_operand.vmem [shape: f32[1,384], index: 3, kind: input, shape index: {}]
  %s4 = inlined_call_operand.hbm [shape: f32[128,384], index: 4, kind: input, shape index: {}]
  %s5 = inlined_call_operand.vmem [shape: f32[1,384], index: 5, kind: input, shape index: {}]
  %s6 = inlined_call_operand.hbm [shape: f32[8,128], index: 6, kind: output, shape index: {}, may-alias: {1,6}]
  %s7 = sld [smem:[#allocation0]]
  $region46: #{tpu_custom_call.1} parent=0
    _
  %s9 = ssub.s32 1, %s7
  %s10 = scalar_select 0, %s9, %s7
  $region1: #{tpu_custom_call.1} parent=0
    #allocation2 [shape = 'u8[4096]{0}', space=vmem, size = 0x1000, scoped, tag = 'input window, operand 1, single buffered']
    #allocation3 [shape = 's32[1]{0}', space=sflag, size = 0x4, scoped, tag = 'scoped memory for tpu_custom_call.1']
    #allocation4 [shape = 's32[1]{0}', space=sflag, size = 0x4, scoped, tag = 'scoped memory for tpu_custom_call.1']
    #allocation5 [shape = 'u8[24576]{0}', space=vmem, size = 0x6000, scoped, tag = 'input window, operand 2, single buffered']
    #allocation6 [shape = 's32[1]{0}', space=sflag, size = 0x4, scoped, tag = 'scoped memory for tpu_custom_call.1']
    #allocation7 [shape = 'u8[196608]{0}', space=vmem, size = 0x30000, scoped, tag = 'input window, operand 4, single buffered']
    #allocation8 [shape = 'u8[4096]{0}', space=vmem, size = 0x1000, scoped, tag = 'output window, operand 0, single buffered']
    %11 = vsyncpa [#allocation3], 0
    %12 = vsyncpa [#allocation6], 0
    %13 = vsyncpa [#allocation4], 0
    // Predicated region
    $region2: #{tpu_custom_call.1} parent=1 // pred_check
      _
    $region3: #{tpu_custom_call.1} parent=1 // pred_check_branch
      %15 = sbr.rel (0) target = $region5
    $region4: #{tpu_custom_call.1} parent=1 // pred_region
      _
    $region5: #{tpu_custom_call.1} parent=1 // pred_fallthru
      _
    // Predicated region
    $region6: #{tpu_custom_call.1} parent=1 // pred_check
      _
    $region7: #{tpu_custom_call.1} parent=1 // pred_check_branch
      %17 = sbr.rel (0) target = $region9
    $region8: #{tpu_custom_call.1} parent=1 // pred_region
      %s19 = ssub.s32 128, 128
      %20 = vsyncadd [#allocation3], %s19
      %s22 = sshll.u32 [#allocation2], 4
      %s23 = int_to_ptr.vmem [resolvable:$true] %s22
      %25 = dma.hbm_to_vmem [thread:$0]  %s1, 128, %s23, [#allocation3]
    $region9: #{tpu_custom_call.1} parent=1 // pred_fallthru
      _
    // Predicated region
    $region10: #{tpu_custom_call.1} parent=1 // pred_check
      _
    $region11: #{tpu_custom_call.1} parent=1 // pred_check_branch
      %27 = sbr.rel (0) target = $region13
    $region12: #{tpu_custom_call.1} parent=1 // pred_region
      %s29 = ssub.s32 768, 768
      %30 = vsyncadd [#allocation6], %s29
      %s31 = sshll.u32 [#allocation5], 4
      %s32 = int_to_ptr.vmem [resolvable:$true] %s31
      %37 = dma.hbm_to_vmem [thread:$0]  %s2, 768, %s32, [#allocation6], 384, 384, 24
    $region13: #{tpu_custom_call.1} parent=1 // pred_fallthru
      _
    // Predicated region
    $region14: #{tpu_custom_call.1} parent=1 // pred_check
      _
    $region15: #{tpu_custom_call.1} parent=1 // pred_check_branch
      %39 = sbr.rel (0) target = $region17
    $region16: #{tpu_custom_call.1} parent=1 // pred_region
      _
    $region17: #{tpu_custom_call.1} parent=1 // pred_fallthru
      _
    // Predicated region
    $region18: #{tpu_custom_call.1} parent=1 // pred_check
      _
    $region19: #{tpu_custom_call.1} parent=1 // pred_check_branch
      %41 = sbr.rel (0) target = $region21
    $region20: #{tpu_custom_call.1} parent=1 // pred_region
      %s43 = ssub.s32 6144, 6144
      %44 = vsyncadd [#allocation6], %s43
      %s45 = sshll.u32 [#allocation7], 4
      %s46 = int_to_ptr.vmem [resolvable:$true] %s45
      %51 = dma.hbm_to_vmem [thread:$0]  %s4, 6144, %s46, [#allocation6], 384, 384, 24
    $region21: #{tpu_custom_call.1} parent=1 // pred_fallthru
      _
    // Predicated region
    $region22: #{tpu_custom_call.1} parent=1 // pred_check
      _
    $region23: #{tpu_custom_call.1} parent=1 // pred_check_branch
      %53 = sbr.rel (0) target = $region25
    $region24: #{tpu_custom_call.1} parent=1 // pred_region
      _
    $region25: #{tpu_custom_call.1} parent=1 // pred_fallthru
      _
    // Predicated region
    $region26: #{tpu_custom_call.1} parent=1 // pred_check
      _
    $region27: #{tpu_custom_call.1} parent=1 // pred_check_branch
      %55 = sbr.rel (0) target = $region29
    $region28: #{tpu_custom_call.1} parent=1 // pred_region
      %56 = dma.done [#allocation3], 128
    $region29: #{tpu_custom_call.1} parent=1 // pred_fallthru
      _
    // Predicated region
    $region30: #{tpu_custom_call.1} parent=1 // pred_check
      _
    $region31: #{tpu_custom_call.1} parent=1 // pred_check_branch
      %58 = sbr.rel (0) target = $region33
    $region32: #{tpu_custom_call.1} parent=1 // pred_region
      %59 = dma.done [#allocation6], 768
    $region33: #{tpu_custom_call.1} parent=1 // pred_fallthru
      _
    // Predicated region
    $region34: #{tpu_custom_call.1} parent=1 // pred_check
      _
    $region35: #{tpu_custom_call.1} parent=1 // pred_check_branch
      %61 = sbr.rel (0) target = $region37
    $region36: #{tpu_custom_call.1} parent=1 // pred_region
      %62 = dma.done [#allocation6], 6144
    $region37: #{tpu_custom_call.1} parent=1 // pred_fallthru
      _
    %v63 = vld [vmem:[%s0] sm:$0xff]
    %v64 = vld [vmem:[#allocation2] sm:$0xff]
    %v65 = vld [vmem:[#allocation5] sm:$0xff]
    %v66 = vld [vmem:[#allocation5 + $0x8] sm:$0xff]
    %v67 = vld [vmem:[#allocation5 + $0x10] sm:$0xff]
    %v68 = vld [vmem:[#allocation5 + $0x18] sm:$0xff]
    %v69 = vld [vmem:[#allocation5 + $0x20] sm:$0xff]
    %v70 = vld [vmem:[#allocation5 + $0x28] sm:$0xff]
    %v71 = vld [vmem:[%s3] sm:$0x7]
    %v73 = vlaneseq
    %v74 = vshrl.u32 %v73, 7
    %v75 = vsub.s32 0, %v74
    %v76 = vrot.slane %v71, %v75
    %v77 = vlaneseq
    %v78 = vshrl.u32 %v77, 7
    %v79 = vsub.s32 1, %v78
    %v80 = vrot.slane %v71, %v79
    %v81 = vlaneseq
    %v82 = vshrl.u32 %v81, 7
    %v83 = vsub.s32 2, %v82
    %v84 = vrot.slane %v71, %v83
    %vm88 = vcmask 130048
    %v90 = vsel %vm88, %v63, 0
    %92 = vmatprep.subr.mxu0 0.0
    %93 = vmatpush1.msra.mxu0 0.0
    %94 = vmatprep.subr.mxu0 0.0
    %95 = vmatpush1.msra.mxu0 0.0
    %96 = vmatprep.subr.mxu0 0.0
    %97 = vmatpush1.msra.mxu0 0.0
    %98 = vmatprep.subr.mxu0 0.0
    %99 = vmatpush1.msra.mxu0 0.0
    %100 = vmatprep.subr.mxu0 0.0
    %101 = vmatpush1.msra.mxu0 0.0
    %102 = vmatprep.subr.mxu0 0.0
    %103 = vmatpush1.msra.mxu0 0.0
    %104 = vmatprep.subr.mxu0 0.0
    %105 = vmatpush1.msra.mxu0 0.0
    %106 = vmatprep.subr.mxu0 0.0
    %107 = vmatpush1.msra.mxu0 0.0
    %108 = vmatprep.subr.mxu0 0.0
    %109 = vmatpush1.msra.mxu0 0.0
    %110 = vmatprep.subr.mxu0 0.0
    %111 = vmatpush1.msra.mxu0 0.0
    %112 = vmatprep.subr.mxu0 0.0
    %113 = vmatpush1.msra.mxu0 0.0
    %114 = vmatprep.subr.mxu0 0.0
    %115 = vmatpush1.msra.mxu0 0.0
    %116 = vmatprep.subr.mxu0 0.0
    %117 = vmatpush1.msra.mxu0 0.0
    %118 = vmatprep.subr.mxu0 0.0
    %119 = vmatpush1.msra.mxu0 0.0
    %120 = vmatprep.subr.mxu0 %v69
    %121 = vmatpush1.msra.mxu0 %v68
    %122 = vmatprep.subr.mxu0 %v66
    %123 = vmatpush1.msra.mxu0 %v65
    %124 = vmatprep.subr.mxu0 0.0
    %125 = vmatpush2.msra.mxu0 0.0
    %126 = vmatprep.subr.mxu0 0.0
    %127 = vmatpush2.msra.mxu0 0.0
    %128 = vmatprep.subr.mxu0 0.0
    %129 = vmatpush2.msra.mxu0 0.0
    %130 = vmatprep.subr.mxu0 0.0
    %131 = vmatpush2.msra.mxu0 0.0
    %132 = vmatprep.subr.mxu0 0.0
    %133 = vmatpush2.msra.mxu0 0.0
    %134 = vmatprep.subr.mxu0 0.0
    %135 = vmatpush2.msra.mxu0 0.0
    %136 = vmatprep.subr.mxu0 0.0
    %137 = vmatpush2.msra.mxu0 0.0
    %138 = vmatprep.subr.mxu0 0.0
    %139 = vmatpush2.msra.mxu0 0.0
    %140 = vmatprep.subr.mxu0 0.0
    %141 = vmatpush2.msra.mxu0 0.0
    %142 = vmatprep.subr.mxu0 0.0
    %143 = vmatpush2.msra.mxu0 0.0
    %144 = vmatprep.subr.mxu0 0.0
    %145 = vmatpush2.msra.mxu0 0.0
    %146 = vmatprep.subr.mxu0 0.0
    %147 = vmatpush2.msra.mxu0 0.0
    %148 = vmatprep.subr.mxu0 0.0
    %149 = vmatpush2.msra.mxu0 0.0
    %150 = vmatprep.subr.mxu0 0.0
    %151 = vmatpush2.msra.mxu0 0.0
    %152 = vmatprep.subr.mxu0 0.0
    %153 = vmatpush2.msra.mxu0 0.0
    %154 = vmatprep.subr.mxu0 0.0
    %155 = vmatpush2.msra.mxu0 0.0
    %156 = vmatprep.mubr.f32.mxu0 0.0
    %157 = vmatmul.mubr.f32.gmra.mxu0 %v90
    %v158 = vpop.f32.mrf.mxu0
    %v159 = vadd.f32 %v76, %v158
    %v160 = vpop.f32.mrf.mxu0
    %v161 = vadd.f32 %v80, %v160
    %162 = vdwg.mxu0
    %163 = vmatprep.subr.mxu0 0.0
    %164 = vmatpush1.msra.mxu0 0.0
    %165 = vmatprep.subr.mxu0 0.0
    %166 = vmatpush1.msra.mxu0 0.0
    %167 = vmatprep.subr.mxu0 0.0
    %168 = vmatpush1.msra.mxu0 0.0
    %169 = vmatprep.subr.mxu0 0.0
    %170 = vmatpush1.msra.mxu0 0.0
    %171 = vmatprep.subr.mxu0 0.0
    %172 = vmatpush1.msra.mxu0 0.0
    %173 = vmatprep.subr.mxu0 0.0
    %174 = vmatpush1.msra.mxu0 0.0
    %175 = vmatprep.subr.mxu0 0.0
    %176 = vmatpush1.msra.mxu0 0.0
    %177 = vmatprep.subr.mxu0 0.0
    %178 = vmatpush1.msra.mxu0 0.0
    %179 = vmatprep.subr.mxu0 0.0
    %180 = vmatpush1.msra.mxu0 0.0
    %181 = vmatprep.subr.mxu0 0.0
    %182 = vmatpush1.msra.mxu0 0.0
    %183 = vmatprep.subr.mxu0 0.0
    %184 = vmatpush1.msra.mxu0 0.0
    %185 = vmatprep.subr.mxu0 0.0
    %186 = vmatpush1.msra.mxu0 0.0
    %187 = vmatprep.subr.mxu0 0.0
    %188 = vmatpush1.msra.mxu0 0.0
    %189 = vmatprep.subr.mxu0 0.0
    %190 = vmatpush1.msra.mxu0 0.0
    %191 = vmatprep.subr.mxu0 0.0
    %192 = vmatpush1.msra.mxu0 %v70
    %193 = vmatprep.subr.mxu0 0.0
    %194 = vmatpush1.msra.mxu0 %v67
    %195 = vmatprep.subr.mxu0 0.0
    %196 = vmatpush2.msra.mxu0 0.0
    %197 = vmatprep.subr.mxu0 0.0
    %198 = vmatpush2.msra.mxu0 0.0
    %199 = vmatprep.subr.mxu0 0.0
    %200 = vmatpush2.msra.mxu0 0.0
    %201 = vmatprep.subr.mxu0 0.0
    %202 = vmatpush2.msra.mxu0 0.0
    %203 = vmatprep.subr.mxu0 0.0
    %204 = vmatpush2.msra.mxu0 0.0
    %205 = vmatprep.subr.mxu0 0.0
    %206 = vmatpush2.msra.mxu0 0.0
    %207 = vmatprep.subr.mxu0 0.0
    %208 = vmatpush2.msra.mxu0 0.0
    %209 = vmatprep.subr.mxu0 0.0
    %210 = vmatpush2.msra.mxu0 0.0
    %211 = vmatprep.subr.mxu0 0.0
    %212 = vmatpush2.msra.mxu0 0.0
    %213 = vmatprep.subr.mxu0 0.0
    %214 = vmatpush2.msra.mxu0 0.0
    %215 = vmatprep.subr.mxu0 0.0
    %216 = vmatpush2.msra.mxu0 0.0
    %217 = vmatprep.subr.mxu0 0.0
    %218 = vmatpush2.msra.mxu0 0.0
    %219 = vmatprep.subr.mxu0 0.0
    %220 = vmatpush2.msra.mxu0 0.0
    %221 = vmatprep.subr.mxu0 0.0
    %222 = vmatpush2.msra.mxu0 0.0
    %223 = vmatprep.subr.mxu0 0.0
    %224 = vmatpush2.msra.mxu0 0.0
    %225 = vmatprep.subr.mxu0 0.0
    %226 = vmatpush2.msra.mxu0 0.0
    %227 = vmatprep.mubr.f32.mxu0 0.0
    %228 = vmatmul.mubr.f32.gmra.mxu0 %v90
    %v229 = vpop.f32.mrf.mxu0
    %v230 = vadd.f32 %v84, %v229
    %v231 = vpop.f32.mrf.mxu0
    %232 = vdwg.mxu0
    %v233 = vld [vmem:[#allocation7] sm:$0xff]
    %v234 = vld [vmem:[#allocation7 + $0x8] sm:$0xff]
    %v235 = vld [vmem:[#allocation7 + $0x10] sm:$0xff]
    %v236 = vld [vmem:[#allocation7 + $0x18] sm:$0xff]
    %v237 = vld [vmem:[#allocation7 + $0x20] sm:$0xff]
    %v238 = vld [vmem:[#allocation7 + $0x28] sm:$0xff]
    %v239 = vld [vmem:[#allocation7 + $0x30] sm:$0xff]
    %v240 = vld [vmem:[#allocation7 + $0x38] sm:$0xff]
    %v241 = vld [vmem:[#allocation7 + $0x40] sm:$0xff]
    %v242 = vld [vmem:[#allocation7 + $0x48] sm:$0xff]
    %v243 = vld [vmem:[#allocation7 + $0x50] sm:$0xff]
    %v244 = vld [vmem:[#allocation7 + $0x58] sm:$0xff]
    %v245 = vld [vmem:[#allocation7 + $0x60] sm:$0xff]
    %v246 = vld [vmem:[#allocation7 + $0x68] sm:$0xff]
    %v247 = vld [vmem:[#allocation7 + $0x70] sm:$0xff]
    %v248 = vld [vmem:[#allocation7 + $0x78] sm:$0xff]
    %v249 = vld [vmem:[#allocation7 + $0x80] sm:$0xff]
    %v250 = vld [vmem:[#allocation7 + $0x88] sm:$0xff]
    %v251 = vld [vmem:[#allocation7 + $0x90] sm:$0xff]
    %v252 = vld [vmem:[#allocation7 + $0x98] sm:$0xff]
    %v253 = vld [vmem:[#allocation7 + $0xa0] sm:$0xff]
    %v254 = vld [vmem:[#allocation7 + $0xa8] sm:$0xff]
    %v255 = vld [vmem:[#allocation7 + $0xb0] sm:$0xff]
    %v256 = vld [vmem:[#allocation7 + $0xb8] sm:$0xff]
    %v257 = vld [vmem:[#allocation7 + $0xc0] sm:$0xff]
    %v258 = vld [vmem:[#allocation7 + $0xc8] sm:$0xff]
    %v259 = vld [vmem:[#allocation7 + $0xd0] sm:$0xff]
    %v260 = vld [vmem:[#allocation7 + $0xd8] sm:$0xff]
    %v261 = vld [vmem:[#allocation7 + $0xe0] sm:$0xff]
    %v262 = vld [vmem:[#allocation7 + $0xe8] sm:$0xff]
    %v263 = vld [vmem:[#allocation7 + $0xf0] sm:$0xff]
    %v264 = vld [vmem:[#allocation7 + $0xf8] sm:$0xff]
    %v265 = vld [vmem:[#allocation7 + $0x100] sm:$0xff]
    %v266 = vld [vmem:[#allocation7 + $0x108] sm:$0xff]
    %v267 = vld [vmem:[#allocation7 + $0x110] sm:$0xff]
    %v268 = vld [vmem:[#allocation7 + $0x118] sm:$0xff]
    %v269 = vld [vmem:[#allocation7 + $0x120] sm:$0xff]
    %v270 = vld [vmem:[#allocation7 + $0x128] sm:$0xff]
    %v271 = vld [vmem:[#allocation7 + $0x130] sm:$0xff]
    %v272 = vld [vmem:[#allocation7 + $0x138] sm:$0xff]
    %v273 = vld [vmem:[#allocation7 + $0x140] sm:$0xff]
    %v274 = vld [vmem:[#allocation7 + $0x148] sm:$0xff]
    %v275 = vld [vmem:[#allocation7 + $0x150] sm:$0xff]
    %v276 = vld [vmem:[#allocation7 + $0x158] sm:$0xff]
    %v277 = vld [vmem:[#allocation7 + $0x160] sm:$0xff]
    %v278 = vld [vmem:[#allocation7 + $0x168] sm:$0xff]
    %v279 = vld [vmem:[#allocation7 + $0x170] sm:$0xff]
    %v280 = vld [vmem:[#allocation7 + $0x178] sm:$0xff]
    %v281 = vld [vmem:[%s5] sm:$0x7]
    %v283 = vlaneseq
    %v284 = vshrl.u32 %v283, 7
    %v285 = vsub.s32 0, %v284
    %v286 = vrot.slane %v281, %v285
    %v287 = vlaneseq
    %v288 = vshrl.u32 %v287, 7
    %v289 = vsub.s32 1, %v288
    %v290 = vrot.slane %v281, %v289
    %v291 = vlaneseq
    %v292 = vshrl.u32 %v291, 7
    %v293 = vsub.s32 2, %v292
    %v294 = vrot.slane %v281, %v293
    %298 = vmatprep.subr.mxu0 %v279
    %299 = vmatpush1.msra.mxu0 %v278
    %300 = vmatprep.subr.mxu0 %v276
    %301 = vmatpush1.msra.mxu0 %v275
    %302 = vmatprep.subr.mxu0 %v273
    %303 = vmatpush1.msra.mxu0 %v272
    %304 = vmatprep.subr.mxu0 %v270
    %305 = vmatpush1.msra.mxu0 %v269
    %306 = vmatprep.subr.mxu0 %v267
    %307 = vmatpush1.msra.mxu0 %v266
    %308 = vmatprep.subr.mxu0 %v264
    %309 = vmatpush1.msra.mxu0 %v263
    %310 = vmatprep.subr.mxu0 %v261
    %311 = vmatpush1.msra.mxu0 %v260
    %312 = vmatprep.subr.mxu0 %v258
    %313 = vmatpush1.msra.mxu0 %v257
    %314 = vmatprep.subr.mxu0 %v255
    %315 = vmatpush1.msra.mxu0 %v254
    %316 = vmatprep.subr.mxu0 %v252
    %317 = vmatpush1.msra.mxu0 %v251
    %318 = vmatprep.subr.mxu0 %v249
    %319 = vmatpush1.msra.mxu0 %v248
    %320 = vmatprep.subr.mxu0 %v246
    %321 = vmatpush1.msra.mxu0 %v245
    %322 = vmatprep.subr.mxu0 %v243
    %323 = vmatpush1.msra.mxu0 %v242
    %324 = vmatprep.subr.mxu0 %v240
    %325 = vmatpush1.msra.mxu0 %v239
    %326 = vmatprep.subr.mxu0 %v237
    %327 = vmatpush1.msra.mxu0 %v236
    %328 = vmatprep.subr.mxu0 %v234
    %329 = vmatpush1.msra.mxu0 %v233
    %330 = vmatprep.subr.mxu0 0.0
    %331 = vmatpush2.msra.mxu0 0.0
    %332 = vmatprep.subr.mxu0 0.0
    %333 = vmatpush2.msra.mxu0 0.0
    %334 = vmatprep.subr.mxu0 0.0
    %335 = vmatpush2.msra.mxu0 0.0
    %336 = vmatprep.subr.mxu0 0.0
    %337 = vmatpush2.msra.mxu0 0.0
    %338 = vmatprep.subr.mxu0 0.0
    %339 = vmatpush2.msra.mxu0 0.0
    %340 = vmatprep.subr.mxu0 0.0
    %341 = vmatpush2.msra.mxu0 0.0
    %342 = vmatprep.subr.mxu0 0.0
    %343 = vmatpush2.msra.mxu0 0.0
    %344 = vmatprep.subr.mxu0 0.0
    %345 = vmatpush2.msra.mxu0 0.0
    %346 = vmatprep.subr.mxu0 0.0
    %347 = vmatpush2.msra.mxu0 0.0
    %348 = vmatprep.subr.mxu0 0.0
    %349 = vmatpush2.msra.mxu0 0.0
    %350 = vmatprep.subr.mxu0 0.0
    %351 = vmatpush2.msra.mxu0 0.0
    %352 = vmatprep.subr.mxu0 0.0
    %353 = vmatpush2.msra.mxu0 0.0
    %354 = vmatprep.subr.mxu0 0.0
    %355 = vmatpush2.msra.mxu0 0.0
    %356 = vmatprep.subr.mxu0 0.0
    %357 = vmatpush2.msra.mxu0 0.0
    %358 = vmatprep.subr.mxu0 0.0
    %359 = vmatpush2.msra.mxu0 0.0
    %360 = vmatprep.subr.mxu0 0.0
    %361 = vmatpush2.msra.mxu0 0.0
    %362 = vmatprep.mubr.f32.mxu0 0.0
    %363 = vmatmul.mubr.f32.gmra.mxu0 %v64
    %v364 = vpop.f32.mrf.mxu0
    %v365 = vadd.f32 %v286, %v364
    %v366 = vpop.f32.mrf.mxu0
    %v367 = vadd.f32 %v290, %v366
    %368 = vdwg.mxu0
    %369 = vmatprep.subr.mxu0 0.0
    %370 = vmatpush1.msra.mxu0 %v280
    %371 = vmatprep.subr.mxu0 0.0
    %372 = vmatpush1.msra.mxu0 %v277
    %373 = vmatprep.subr.mxu0 0.0
    %374 = vmatpush1.msra.mxu0 %v274
    %375 = vmatprep.subr.mxu0 0.0
    %376 = vmatpush1.msra.mxu0 %v271
    %377 = vmatprep.subr.mxu0 0.0
    %378 = vmatpush1.msra.mxu0 %v268
    %379 = vmatprep.subr.mxu0 0.0
    %380 = vmatpush1.msra.mxu0 %v265
    %381 = vmatprep.subr.mxu0 0.0
    %382 = vmatpush1.msra.mxu0 %v262
    %383 = vmatprep.subr.mxu0 0.0
    %384 = vmatpush1.msra.mxu0 %v259
    %385 = vmatprep.subr.mxu0 0.0
    %386 = vmatpush1.msra.mxu0 %v256
    %387 = vmatprep.subr.mxu0 0.0
    %388 = vmatpush1.msra.mxu0 %v253
    %389 = vmatprep.subr.mxu0 0.0
    %390 = vmatpush1.msra.mxu0 %v250
    %391 = vmatprep.subr.mxu0 0.0
    %392 = vmatpush1.msra.mxu0 %v247
    %393 = vmatprep.subr.mxu0 0.0
    %394 = vmatpush1.msra.mxu0 %v244
    %395 = vmatprep.subr.mxu0 0.0
    %396 = vmatpush1.msra.mxu0 %v241
    %397 = vmatprep.subr.mxu0 0.0
    %398 = vmatpush1.msra.mxu0 %v238
    %399 = vmatprep.subr.mxu0 0.0
    %400 = vmatpush1.msra.mxu0 %v235
    %401 = vmatprep.subr.mxu0 0.0
    %402 = vmatpush2.msra.mxu0 0.0
    %403 = vmatprep.subr.mxu0 0.0
    %404 = vmatpush2.msra.mxu0 0.0
    %405 = vmatprep.subr.mxu0 0.0
    %406 = vmatpush2.msra.mxu0 0.0
    %407 = vmatprep.subr.mxu0 0.0
    %408 = vmatpush2.msra.mxu0 0.0
    %409 = vmatprep.subr.mxu0 0.0
    %410 = vmatpush2.msra.mxu0 0.0
    %411 = vmatprep.subr.mxu0 0.0
    %412 = vmatpush2.msra.mxu0 0.0
    %413 = vmatprep.subr.mxu0 0.0
    %414 = vmatpush2.msra.mxu0 0.0
    %415 = vmatprep.subr.mxu0 0.0
    %416 = vmatpush2.msra.mxu0 0.0
    %417 = vmatprep.subr.mxu0 0.0
    %418 = vmatpush2.msra.mxu0 0.0
    %419 = vmatprep.subr.mxu0 0.0
    %420 = vmatpush2.msra.mxu0 0.0
    %421 = vmatprep.subr.mxu0 0.0
    %422 = vmatpush2.msra.mxu0 0.0
    %423 = vmatprep.subr.mxu0 0.0
    %424 = vmatpush2.msra.mxu0 0.0
    %425 = vmatprep.subr.mxu0 0.0
    %426 = vmatpush2.msra.mxu0 0.0
    %427 = vmatprep.subr.mxu0 0.0
    %428 = vmatpush2.msra.mxu0 0.0
    %429 = vmatprep.subr.mxu0 0.0
    %430 = vmatpush2.msra.mxu0 0.0
    %431 = vmatprep.subr.mxu0 0.0
    %432 = vmatpush2.msra.mxu0 0.0
    %433 = vmatprep.mubr.f32.mxu0 0.0
    %434 = vmatmul.mubr.f32.gmra.mxu0 %v64
    %v435 = vpop.f32.mrf.mxu0
    %v436 = vadd.f32 %v294, %v435
    %v437 = vpop.f32.mrf.mxu0
    %438 = vdwg.mxu0
    %v439 = vadd.f32 %v159, %v365
    %v440 = vxor.u32 %v439, 2147483648
    %v441 = vmul.f32 %v440, 1.442695
    %v442 = vpow.pop %v441
    %v443 = vadd.f32 %v442, 1.0
    %v444 = vrcp.pop %v443
    %v445 = vmul.f32 1.0, %v444
    %v446 = vadd.f32 %v161, %v367
    %v447 = vxor.u32 %v446, 2147483648
    %v448 = vmul.f32 %v447, 1.442695
    %v449 = vpow.pop %v448
    %v450 = vadd.f32 %v449, 1.0
    %v451 = vrcp.pop %v450
    %v452 = vmul.f32 1.0, %v451
    %v453 = vmul.f32 %v445, %v436
    %v454 = vadd.f32 %v230, %v453
    %v455 = vtanh.pop %v454
    %v456 = vmul.f32 %v452, %v64
    %v457 = vsub.f32 1.0, %v452
    %v458 = vmul.f32 %v457, %v455
    %v459 = vadd.f32 %v456, %v458
    %460 = vst [vmem:[#allocation8] sm:$0xff] %v459
    // Predicated region
    $region38: #{tpu_custom_call.1} parent=1 // pred_check
      _
    $region39: #{tpu_custom_call.1} parent=1 // pred_check_branch
      %462 = sbr.rel (0) target = $region41
    $region40: #{tpu_custom_call.1} parent=1 // pred_region
      %s464 = ssub.s32 128, 128
      %465 = vsyncadd [#allocation4], %s464
      %s467 = sshll.u32 [#allocation8], 4
      %s468 = int_to_ptr.vmem [resolvable:$true] %s467
      %470 = dma.vmem_to_hbm [thread:$0]  %s468, 128, %s6, [#allocation4]
    $region41: #{tpu_custom_call.1} parent=1 // pred_fallthru
      _
    // Predicated region
    $region42: #{tpu_custom_call.1} parent=1 // pred_check
      _
    $region43: #{tpu_custom_call.1} parent=1 // pred_check_branch
      %472 = sbr.rel (0) target = $region45
    $region44: #{tpu_custom_call.1} parent=1 // pred_region
      %473 = dma.done [#allocation4], 128
    $region45: #{tpu_custom_call.1} parent=1 // pred_fallthru
      _
    %474 = vsyncpa [#allocation3], 1
    %475 = vsyncpa [#allocation6], 1
    %476 = vsyncpa [#allocation4], 1

</llo_original>
